<compile_context>
chip_gen: v7x
topology: tpu7x:2x2x1
jax: 0.10.0
libtpu: 0.0.40
codegen_flags: <defaults>
</compile_context>

<pallas_src>
import functools

import jax
import jax.numpy as jnp
from jax import lax
from jax.experimental import pallas as pl
from jax.experimental.pallas import tpu as pltpu


def _round_up(x: int, m: int) -> int:
    return ((x + m - 1) // m) * m


def _vreg_padded(*dims) -> int:
    """Element count of a VMEM buffer padded to (8, 128) vreg tiles."""
    d = list(dims)
    if len(d) >= 1:
        d[-1] = _round_up(d[-1], 128)
    if len(d) >= 2:
        d[-2] = _round_up(d[-2], 8)
    n = 1
    for v in d:
        n *= v
    return n


def _pick_sl_tile(sl: int, max_tile: int) -> int:
    """Pick an S*Ls tile: full extent if small, else a 128-multiple divisor."""
    if sl <= max_tile:
        return sl
    for t in range(max_tile - max_tile % 128, 127, -128):
        if sl % t == 0:
            return t
    # TODO(synk): ragged SL with no 128-multiple divisor falls back to a single
    # full-extent block; pad SL in the wrapper if that ever exceeds VMEM.
    return sl


# ------------------------------ Pallas kernel ------------------------------

def _proto_sim_kernel(tgt_t_ref, sup_ref, test_ref, sim_ref, proto_ref,
                      acc_ref, cnt_ref, *, compute_dtype):
    """Fused prototype + similarity.

    Grid: (B, K) where K tiles the flattened support dimension SL = S*Ls
    (last axis, "arbitrary" → accumulator pattern).

    tgt_t_ref : (T, tile_sl)    transposed one-hot targets slice  (f32)
    sup_ref   : (tile_sl, D)    flattened support reps slice      (f32)
    test_ref  : (S, Lt, D)      test reps (same block for all k)  (f32)
    sim_ref   : (Lt, T)         output similarity                 (f32)
    proto_ref : (T, D)          output prototypes                 (f32)
    acc_ref   : (T, D) f32      VMEM scratch: sum_reps accumulator
    cnt_ref   : (T, 1) f32      VMEM scratch: tag_count accumulator
    """
    k = pl.program_id(1)

    @pl.when(k == 0)
    def _init():
        acc_ref[...] = jnp.zeros_like(acc_ref)
        cnt_ref[...] = jnp.zeros_like(cnt_ref)

    tgt = tgt_t_ref[...]                                     # (T, tile_sl) f32
    sup = sup_ref[...]                                       # (tile_sl, D) f32

    # sum_reps[t, d] += sum_l targets[t, l] * support[l, d]   (MXU, bf16 in,
    # f32 accumulate; one-hot targets are exact in bf16)
    acc_ref[...] += jnp.dot(tgt.astype(compute_dtype),
                            sup.astype(compute_dtype),
                            preferred_element_type=jnp.float32)
    # tag_count[t] += number of support tokens with tag t (exact, f32)
    cnt_ref[...] += jnp.sum(tgt, axis=1, keepdims=True)

    @pl.when(k == pl.num_programs(1) - 1)
    def _finalize():
        # "remove_0": divide by (count + 1e-4); exact reciprocal — proto is a
        # user-visible f32 output.
        inv_count = 1.0 / (cnt_ref[...] + 1e-4)              # (T, 1)
        proto = acc_ref[...] * inv_count                     # (T, D) f32
        proto_ref[...] = proto

        # test_reps mean over the support dimension (axis 0), in f32
        test_mean = jnp.mean(test_ref[...], axis=0)          # (Lt, D)

        # reps_dot: sim = test_mean @ proto^T  (contract feature dim, bf16 MXU
        # operands, f32 accumulation)
        sim = lax.dot_general(test_mean.astype(compute_dtype),
                              proto.astype(compute_dtype),
                              (((1,), (1,)), ((), ())),
                              preferred_element_type=jnp.float32)  # (Lt, T)
        sim_ref[...] = sim


# ------------------------------ host wrapper -------------------------------

def _proto_sim(test_reps, support_reps, support_targets, *,
               use_bf16=True, max_sl_tile=1024):
    """test: (B,S,Lt,D), support: (B,S,Ls,D), targets: (B,S,Ls,T)
    -> sim (B,Lt,T) f32, prototypes (B,T,D) f32."""
    B, S, Lt, D = test_reps.shape
    Ls = support_reps.shape[2]
    T = support_targets.shape[-1]
    SL = S * Ls

    compute_dtype = jnp.bfloat16 if use_bf16 else jnp.float32

    # Free reshapes (merge adjacent dims — no copy). No pad, no astype: the
    # big tensors go to the kernel untouched; bf16 casts happen in-kernel.
    sup = support_reps.reshape(B, SL, D)
    tst = test_reps
    # Tiny transpose of the one-hot targets (T << D) → natural (T,SL)x(SL,D)
    # MXU layout and a natural (T,1) lane-reduce for the tag counts.
    tgt_t = jnp.swapaxes(support_targets.reshape(B, SL, T), -1, -2)  # (B,T,SL)

    tile_sl = _pick_sl_tile(SL, max_sl_tile)
    n_sl = SL // tile_sl

    # VMEM budget: double-buffered input/output blocks + scratch, vreg-padded.
    vmem_need = 4 * (
        2 * (_vreg_padded(T, tile_sl) + _vreg_padded(tile_sl, D)
             + _vreg_padded(S, Lt, D))
        + 2 * (_vreg_padded(Lt, T) + _vreg_padded(T, D))
        + _vreg_padded(T, D) + _vreg_padded(T, 1))
    vmem_limit = int(min(max(2 * vmem_need, 32 * 1024 * 1024),
                         96 * 1024 * 1024))

    flops = 2 * B * (T * SL * D + Lt * T * D)
    bytes_accessed = 4 * (B * T * SL + B * SL * D + B * S * Lt * D
                          + B * Lt * T + B * T * D)

    kernel = functools.partial(_proto_sim_kernel, compute_dtype=compute_dtype)

    sim, proto = pl.pallas_call(
        kernel,
        out_shape=(jax.ShapeDtypeStruct((B, Lt, T), jnp.float32),
                   jax.ShapeDtypeStruct((B, T, D), jnp.float32)),
        grid=(B, n_sl),
        in_specs=[
            pl.BlockSpec((None, T, tile_sl), lambda b, k: (b, 0, k)),
            pl.BlockSpec((None, tile_sl, D), lambda b, k: (b, k, 0)),
            # test block index ignores k → fetched once per batch element
            pl.BlockSpec((None, S, Lt, D), lambda b, k: (b, 0, 0, 0)),
        ],
        out_specs=(
            pl.BlockSpec((None, Lt, T), lambda b, k: (b, 0, 0)),
            pl.BlockSpec((None, T, D), lambda b, k: (b, 0, 0)),
        ),
        scratch_shapes=[pltpu.VMEM((T, D), jnp.float32),
                        pltpu.VMEM((T, 1), jnp.float32)],
        compiler_params=pltpu.CompilerParams(
            dimension_semantics=("parallel", "arbitrary"),
            vmem_limit_bytes=vmem_limit),
        cost_estimate=pl.CostEstimate(
            flops=flops, transcendentals=0, bytes_accessed=bytes_accessed),
    )(tgt_t, sup, tst)

    return sim, proto


# --------------------------- module-level wrapper ---------------------------

class ProtoWithAttGCNSimilarityScorerPallas:
    """JAX/Pallas port of ProtowithAttGCNSimilarityScorer (sim_func=reps_dot).

    The GraphConvolution layers built in the PyTorch __init__ are never
    invoked by forward(), so the forward pass needs no parameters.
    """

    def __init__(self, use_bf16: bool = True, max_sl_tile: int = 1024):
        self.use_bf16 = use_bf16
        self._fn = jax.jit(functools.partial(
            _proto_sim, use_bf16=use_bf16, max_sl_tile=max_sl_tile))
        # TODO(synk): opt.gcn_layers GraphConvolution modules are declared in
        # the reference __init__ but unused in forward(); omitted here.

    def forward(self, test_reps, support_reps, test_output_mask,
                support_output_mask, support_targets, label_reps=None):
        B, S, Lt, D = test_reps.shape
        Ls = support_reps.shape[2]
        T = support_targets.shape[-1]

        # reference edge case: target seq-len mismatch -> zero targets
        if support_targets.shape[-2] != Ls:
            support_targets = jnp.zeros((B, S, Ls, T), jnp.float32)

        sim_score, prototype_reps = self._fn(
            test_reps, support_reps, support_targets)
        return sim_score, prototype_reps


# --------------------------------- driver ----------------------------------

if __name__ == "__main__":
    def run_case(B, S, Lt, Ls, D, T, max_sl_tile):
        key = jax.random.PRNGKey(0)
        k1, k2, k3 = jax.random.split(key, 3)

        test_reps = jax.random.normal(k1, (B, S, Lt, D), jnp.float32)
        support_reps = jax.random.normal(k2, (B, S, Ls, D), jnp.float32)
        test_output_mask = jnp.ones((B, Lt), jnp.float32)        # unused in fwd
        support_output_mask = jnp.ones((B, S, Ls), jnp.float32)  # unused in fwd
        tgt_ids = jax.random.randint(k3, (B, S, Ls), 0, T)
        support_targets = jax.nn.one_hot(tgt_ids, T, dtype=jnp.float32)

        scorer = ProtoWithAttGCNSimilarityScorerPallas(
            use_bf16=True, max_sl_tile=max_sl_tile)
        sim_score, prototype_reps = scorer.forward(
            test_reps, support_reps, test_output_mask, support_output_mask,
            support_targets, label_reps=None)
        jax.block_until_ready((sim_score, prototype_reps))

        assert sim_score.shape == (B, Lt, T)
        assert prototype_reps.shape == (B, T, D)
        assert bool(jnp.all(jnp.isfinite(sim_score)))
        assert bool(jnp.all(jnp.isfinite(prototype_reps)))

        # pure-JAX reference (same bf16 rounding of the reps)
        cd = jnp.bfloat16
        tm_ref = jnp.mean(test_reps.astype(cd).astype(jnp.float32), axis=1)
        st_ref = support_targets.reshape(B, S * Ls, T)
        sr_ref = support_reps.reshape(B, S * Ls, D).astype(cd).astype(jnp.float32)
        proto_ref = jnp.einsum('blt,bld->btd', st_ref, sr_ref) / (
            jnp.sum(st_ref, axis=1)[..., None] + 1e-4)
        sim_ref = jnp.einsum('bld,btd->blt', tm_ref, proto_ref)
        assert bool(jnp.allclose(prototype_reps, proto_ref, rtol=2e-2, atol=1e-2))
        assert bool(jnp.allclose(sim_score, sim_ref, rtol=2e-2, atol=2e-2))

    # K = 1 path: SL = 16 fits in a single full-extent tile.
    run_case(B=2, S=2, Lt=8, Ls=8, D=32, T=5, max_sl_tile=1024)
    # K = 2 path: SL = 256 split into two 128-row tiles (exercises the
    # accumulator/finalize structure used for large few-shot sets on v7x).
    run_case(B=2, S=2, Lt=16, Ls=128, D=32, T=5, max_sl_tile=128)

    print("KERNEL_OK")
</pallas_src>

<mosaic_0001>
module attributes {stable_mosaic.version = 11 : i64} {
  func.func @_proto_sim_kernel(%arg0: i32, %arg1: i32, %arg2: memref<1x5x16xf32, #tpu.memory_space<vmem>>, %arg3: memref<1x16x32xf32, #tpu.memory_space<vmem>>, %arg4: memref<1x2x8x32xf32, #tpu.memory_space<vmem>>, %arg5: memref<1x8x5xf32, #tpu.memory_space<vmem>>, %arg6: memref<1x5x32xf32, #tpu.memory_space<vmem>>, %arg7: memref<5x32xf32, #tpu.memory_space<vmem>>, %arg8: memref<5x1xf32, #tpu.memory_space<vmem>>) attributes {dimension_semantics = [#tpu.dimension_semantics<parallel>, #tpu.dimension_semantics<arbitrary>], iteration_bounds = array<i64: 2, 1>, scalar_prefetch = 0 : i64, scratch_operands = 2 : i64, tpu.core_type = #tpu.core_type<tc>, window_params = [{transform_indices = @transform_0, window_bounds = array<i64: 1, 5, 16>}, {transform_indices = @transform_1, window_bounds = array<i64: 1, 16, 32>}, {transform_indices = @transform_2, window_bounds = array<i64: 1, 2, 8, 32>}, {transform_indices = @transform_3, window_bounds = array<i64: 1, 8, 5>}, {transform_indices = @transform_4, window_bounds = array<i64: 1, 5, 32>}]} {
    %c0_i32 = arith.constant 0 : i32
    %0 = arith.cmpi eq, %arg1, %c0_i32 : i32
    %1 = arith.extui %0 : i1 to i32
    %c0_i32_0 = arith.constant 0 : i32
    %2 = arith.cmpi ne, %1, %c0_i32_0 : i32
    scf.if %2 {
      %cst_17 = arith.constant 0.000000e+00 : f32
      %21 = vector.broadcast %cst_17 : f32 to vector<5x32xf32>
      %c0_18 = arith.constant 0 : index
      %c0_19 = arith.constant 0 : index
      %22 = vector.load %arg7[%c0_18, %c0_19] : memref<5x32xf32, #tpu.memory_space<vmem>>, vector<5x32xf32>
      tpu.vector_store %arg7[%c0_18, %c0_19], %21 {strides = array<i32>} : memref<5x32xf32, #tpu.memory_space<vmem>>, vector<5x32xf32>,
      %cst_20 = arith.constant 0.000000e+00 : f32
      %23 = vector.broadcast %cst_20 : f32 to vector<5x1xf32>
      %c0_21 = arith.constant 0 : index
      %c0_22 = arith.constant 0 : index
      %24 = vector.load %arg8[%c0_21, %c0_22] : memref<5x1xf32, #tpu.memory_space<vmem>>, vector<5x1xf32>
      tpu.vector_store %arg8[%c0_21, %c0_22], %23 {strides = array<i32>} : memref<5x1xf32, #tpu.memory_space<vmem>>, vector<5x1xf32>,
    } else {
    }
    %c0 = arith.constant 0 : index
    %c0_1 = arith.constant 0 : index
    %c0_2 = arith.constant 0 : index
    %3 = vector.load %arg2[%c0, %c0_1, %c0_2] : memref<1x5x16xf32, #tpu.memory_space<vmem>>, vector<1x5x16xf32>
    %4 = vector.shape_cast %3 : vector<1x5x16xf32> to vector<5x16xf32>
    %c0_3 = arith.constant 0 : index
    %c0_4 = arith.constant 0 : index
    %c0_5 = arith.constant 0 : index
    %5 = vector.load %arg3[%c0_3, %c0_4, %c0_5] : memref<1x16x32xf32, #tpu.memory_space<vmem>>, vector<1x16x32xf32>
    %6 = vector.shape_cast %5 : vector<1x16x32xf32> to vector<16x32xf32>
    %c0_6 = arith.constant 0 : index
    %c0_7 = arith.constant 0 : index
    %7 = vector.load %arg7[%c0_6, %c0_7] : memref<5x32xf32, #tpu.memory_space<vmem>>, vector<5x32xf32>
    %8 = arith.truncf %4 : vector<5x16xf32> to vector<5x16xbf16>
    %9 = arith.truncf %6 : vector<16x32xf32> to vector<16x32xbf16>
    %cst = arith.constant dense<0.000000e+00> : vector<5x32xf32>
    %10 = tpu.matmul %8, %9, %cst {dimension_numbers = #tpu.dot_dimension_numbers<[1], [0], [0], [1], [0, 0, 1, 1], [], []>} : vector<5x16xbf16>, vector<16x32xbf16>, vector<5x32xf32> -> vector<5x32xf32>
    %11 = arith.addf %7, %10 : vector<5x32xf32>
    %c0_8 = arith.constant 0 : index
    %c0_9 = arith.constant 0 : index
    %12 = vector.load %arg7[%c0_8, %c0_9] : memref<5x32xf32, #tpu.memory_space<vmem>>, vector<5x32xf32>
    tpu.vector_store %arg7[%c0_8, %c0_9], %11 {strides = array<i32>} : memref<5x32xf32, #tpu.memory_space<vmem>>, vector<5x32xf32>,
    %c0_10 = arith.constant 0 : index
    %c0_11 = arith.constant 0 : index
    %13 = vector.load %arg8[%c0_10, %c0_11] : memref<5x1xf32, #tpu.memory_space<vmem>>, vector<5x1xf32>
    %cst_12 = arith.constant dense<0.000000e+00> : vector<5xf32>
    %14 = vector.multi_reduction <add>, %4, %cst_12 [1] : vector<5x16xf32> to vector<5xf32>
    %15 = vector.shape_cast %14 : vector<5xf32> to vector<5x1xf32>
    %16 = arith.addf %13, %15 : vector<5x1xf32>
    %c0_13 = arith.constant 0 : index
    %c0_14 = arith.constant 0 : index
    %17 = vector.load %arg8[%c0_13, %c0_14] : memref<5x1xf32, #tpu.memory_space<vmem>>, vector<5x1xf32>
    tpu.vector_store %arg8[%c0_13, %c0_14], %16 {strides = array<i32>} : memref<5x1xf32, #tpu.memory_space<vmem>>, vector<5x1xf32>,
    %c0_i32_15 = arith.constant 0 : i32
    %18 = arith.cmpi eq, %arg1, %c0_i32_15 : i32
    %19 = arith.extui %18 : i1 to i32
    %c0_i32_16 = arith.constant 0 : i32
    %20 = arith.cmpi ne, %19, %c0_i32_16 : i32
    scf.if %20 {
      %c0_17 = arith.constant 0 : index
      %c0_18 = arith.constant 0 : index
      %21 = vector.load %arg8[%c0_17, %c0_18] : memref<5x1xf32, #tpu.memory_space<vmem>>, vector<5x1xf32>
      %cst_19 = arith.constant 9.99999974E-5 : f32
      %22 = vector.broadcast %cst_19 : f32 to vector<5x1xf32>
      %23 = arith.addf %21, %22 : vector<5x1xf32>
      %cst_20 = arith.constant 1.000000e+00 : f32
      %24 = vector.broadcast %cst_20 : f32 to vector<5x1xf32>
      %25 = arith.divf %24, %23 : vector<5x1xf32>
      %c0_21 = arith.constant 0 : index
      %c0_22 = arith.constant 0 : index
      %26 = vector.load %arg7[%c0_21, %c0_22] : memref<5x32xf32, #tpu.memory_space<vmem>>, vector<5x32xf32>
      %27 = vector.broadcast %25 : vector<5x1xf32> to vector<5x32xf32>
      %28 = arith.mulf %26, %27 : vector<5x32xf32>
      %c0_23 = arith.constant 0 : index
      %c0_24 = arith.constant 0 : index
      %c0_25 = arith.constant 0 : index
      %29 = vector.load %arg6[%c0_23, %c0_24, %c0_25] : memref<1x5x32xf32, #tpu.memory_space<vmem>>, vector<1x5x32xf32>
      %30 = vector.shape_cast %29 : vector<1x5x32xf32> to vector<5x32xf32>
      %31 = vector.shape_cast %28 : vector<5x32xf32> to vector<1x5x32xf32>
      tpu.vector_store %arg6[%c0_23, %c0_24, %c0_25], %31 {strides = array<i32>} : memref<1x5x32xf32, #tpu.memory_space<vmem>>, vector<1x5x32xf32>,
      %c0_26 = arith.constant 0 : index
      %c0_27 = arith.constant 0 : index
      %c0_28 = arith.constant 0 : index
      %c0_29 = arith.constant 0 : index
      %32 = vector.load %arg4[%c0_26, %c0_27, %c0_28, %c0_29] : memref<1x2x8x32xf32, #tpu.memory_space<vmem>>, vector<1x2x8x32xf32>
      %33 = vector.shape_cast %32 : vector<1x2x8x32xf32> to vector<2x8x32xf32>
      %cst_30 = arith.constant dense<0.000000e+00> : vector<8x32xf32>
      %34 = vector.multi_reduction <add>, %33, %cst_30 [0] : vector<2x8x32xf32> to vector<8x32xf32>
      %cst_31 = arith.constant 2.000000e+00 : f32
      %35 = vector.broadcast %cst_31 : f32 to vector<8x32xf32>
      %36 = arith.divf %34, %35 : vector<8x32xf32>
      %37 = arith.truncf %36 : vector<8x32xf32> to vector<8x32xbf16>
      %38 = arith.truncf %28 : vector<5x32xf32> to vector<5x32xbf16>
      %cst_32 = arith.constant dense<0.000000e+00> : vector<8x5xf32>
      %39 = tpu.matmul %37, %38, %cst_32 {dimension_numbers = #tpu.dot_dimension_numbers<[1], [1], [0], [0], [0, 0, 1, 0], [], []>} : vector<8x32xbf16>, vector<5x32xbf16>, vector<8x5xf32> -> vector<8x5xf32>
      %c0_33 = arith.constant 0 : index
      %c0_34 = arith.constant 0 : index
      %c0_35 = arith.constant 0 : index
      %40 = vector.load %arg5[%c0_33, %c0_34, %c0_35] : memref<1x8x5xf32, #tpu.memory_space<vmem>>, vector<1x8x5xf32>
      %41 = vector.shape_cast %40 : vector<1x8x5xf32> to vector<8x5xf32>
      %42 = vector.shape_cast %39 : vector<8x5xf32> to vector<1x8x5xf32>
      tpu.vector_store %arg5[%c0_33, %c0_34, %c0_35], %42 {strides = array<i32>} : memref<1x8x5xf32, #tpu.memory_space<vmem>>, vector<1x8x5xf32>,
    } else {
    }
    return
  }
  func.func @transform_0(%arg0: i32, %arg1: i32) -> (i32, i32, i32) {
    %c0_i32 = arith.constant 0 : i32
    %c0_i32_0 = arith.constant 0 : i32
    return %arg0, %c0_i32, %arg1 : i32, i32, i32
  }
  func.func @transform_1(%arg0: i32, %arg1: i32) -> (i32, i32, i32) {
    %c0_i32 = arith.constant 0 : i32
    %c0_i32_0 = arith.constant 0 : i32
    return %arg0, %arg1, %c0_i32 : i32, i32, i32
  }
  func.func @transform_2(%arg0: i32, %arg1: i32) -> (i32, i32, i32, i32) {
    %c0_i32 = arith.constant 0 : i32
    %c0_i32_0 = arith.constant 0 : i32
    %c0_i32_1 = arith.constant 0 : i32
    %c0_i32_2 = arith.constant 0 : i32
    return %arg0, %c0_i32, %c0_i32_0, %c0_i32_1 : i32, i32, i32, i32
  }
  func.func @transform_3(%arg0: i32, %arg1: i32) -> (i32, i32, i32) {
    %c0_i32 = arith.constant 0 : i32
    %c0_i32_0 = arith.constant 0 : i32
    %c0_i32_1 = arith.constant 0 : i32
    return %arg0, %c0_i32, %c0_i32_0 : i32, i32, i32
  }
  func.func @transform_4(%arg0: i32, %arg1: i32) -> (i32, i32, i32) {
    %c0_i32 = arith.constant 0 : i32
    %c0_i32_0 = arith.constant 0 : i32
    %c0_i32_1 = arith.constant 0 : i32
    return %arg0, %c0_i32, %c0_i32_0 : i32, i32, i32
  }
}

</mosaic_0001>

<llo_original>
// kernel: _proto_sim.1
$region0: #{_proto_sim.1}
  #allocation0 [shape = 'u32[]', space=smem, size = 0x4, offset = 0x4, fixed_abs, tag = 'smem constant byte address 0x4 - core index']
  #allocation1 [shape = 'u32[144,128]{1,0:T(1,128)}', space=vmem, size = 0x12000, scoped, tag = 'internal scratch']
  #allocation2 [shape = 'f32[5,32]{1,0:T(8,128)}', space=vmem, size = 0x1000, scoped, tag = 'scratch operand']
  #allocation3 [shape = 'f32[5,1]{1,0:T(8,128)}', space=vmem, size = 0x1000, scoped, tag = 'scratch operand']
  %s0 = inlined_call_operand.vmem [shape: f32[2,5,16], index: 0, kind: input, shape index: {}]
  %s1 = inlined_call_operand.vmem [shape: f32[2,16,32], index: 1, kind: input, shape index: {}]
  %s2 = inlined_call_operand.hbm [shape: f32[2,2,8,32], index: 2, kind: input, shape index: {}]
  %s3 = inlined_call_operand.vmem [shape: f32[2,8,5], index: 3, kind: output, shape index: {0}]
  %s4 = inlined_call_operand.vmem [shape: f32[2,5,32], index: 4, kind: output, shape index: {1}]
  %5 = xla_tuple %s3, %s4
  %s6 = sld [smem:[#allocation0]]
  $region65: #{_proto_sim.1} parent=0
    _
  %s8 = ssub.s32 1, %s6
  %s9 = scalar_select 0, %s8, %s6
  $region1: #{_proto_sim.1} parent=0
    #allocation4 [shape = 'u8[16384]{0}', space=vmem, size = 0x4000, scoped, tag = 'input window, operand 2']
    #allocation5 [shape = 's32[2]{0}', space=sflag, size = 0x8, scoped, tag = 'scoped memory for _proto_sim.1']
    %10 = vsyncpa [#allocation5], 0
    %s11 = scalar_lea.sflag [#allocation5], 1
    %12 = vsyncpa %s11, 0
    loop: start=0, step=1, limit=4
    $region2: #{_proto_sim.1} parent=1 // loop_pre_header
      _
    $region3: #{_proto_sim.1} parent=1 // loop_header
      %s14 = sphi 0, %s18
      %p15 = scmp.ge.s32.totalorder %s14, 4
      %s21 = sphi 0, %s33
      %s22 = sphi 0, %s29
      %s23 = sphi 0, %s21
      %s24 = sphi 0, %s22
      %s25 = sphi 0, %s23
      %s26 = sphi 0, %s24
      %s38 = sphi 0, %s40
      %s41 = sphi 0, %s38
      %s42 = sphi 0, %s41
      %s58 = sphi 0, %s42
      %s66 = sphi 0, %s68
      %s69 = sphi 0, %s66
      %s70 = sphi 0, %s69
      %s86 = sphi 0, %s70
      %s92 = sphi 0, %s94
      %s95 = sphi 0, %s92
      %s96 = sphi 0, %s95
      %s112 = sphi 0, %s96
      %s118 = sphi 0, %s120
      %s121 = sphi 0, %s118
      %s122 = sphi 0, %s121
      %s138 = sphi 0, %s122
      %s144 = sphi 0, %s146
      %s147 = sphi 0, %s144
      %s148 = sphi 0, %s147
      %s164 = sphi 0, %s148
    $region4: #{_proto_sim.1} parent=1 // loop_header_branch
      %17 = sbr.rel (%p15) target = $region8
    $region5: #{_proto_sim.1} parent=1 // loop_body
      %s19 = ssub.s32 %s14, 1
      %s20 = ssub.s32 %s14, 2
      %s27 = sadd.s32 1, %s22
      %p28 = scmp.ge.s32.totalorder %s27, 1
      %s29 = scalar_select %p28, 0, %s27
      %s30 = sadd.s32 1, %s21
      %s31 = scalar_select %p28, %s30, %s21
      %p32 = scmp.ge.s32.totalorder %s31, 2
      %s33 = scalar_select %p32, 0, %s31
      %s34 = ssub.s32 %s21, %s33
      %s35 = ssub.s32 %s22, %s29
      %s36 = sor.u32 %s34, %s35
      %p37 = scmp.eq.s32.totalorder %s36, 0
      %s39 = sadd.s32 %s38, 1
      %s40 = scalar_select %p37, %s38, %s39
      %p43 = pneg %p37
      %p44 = scmp.eq.s32.totalorder %s14, 1
      %p45 = por %p43, %p44
      %p46 = scmp.ne.s32.totalorder %s38, %s41
      %p47 = scmp.eq.s32.totalorder %s14, 0
      %p48 = por %p46, %p47
      %p49 = scmp.ne.s32.totalorder %s38, %s41
      %p50 = scmp.eq.s32.totalorder %s19, 1
      %p51 = por %p49, %p50
      %p52 = scmp.ne.s32.totalorder %s41, %s42
      %p53 = scmp.eq.s32.totalorder %s19, 0
      %p54 = por %p52, %p53
      %p55 = scmp.ne.s32.totalorder %s41, %s42
      %p56 = scmp.eq.s32.totalorder %s20, 1
      %p57 = por %p55, %p56
      %p59 = scmp.ne.s32.totalorder %s42, %s58
      %p60 = scmp.eq.s32.totalorder %s20, 0
      %p61 = por %p59, %p60
      %s62 = ssub.s32 %s21, %s33
      %s63 = ssub.s32 %s22, %s29
      %s64 = sor.u32 %s62, %s63
      %p65 = scmp.eq.s32.totalorder %s64, 0
      %s67 = sadd.s32 %s66, 1
      %s68 = scalar_select %p65, %s66, %s67
      %p71 = pneg %p65
      %p72 = scmp.eq.s32.totalorder %s14, 1
      %p73 = por %p71, %p72
      %p74 = scmp.ne.s32.totalorder %s66, %s69
      %p75 = scmp.eq.s32.totalorder %s14, 0
      %p76 = por %p74, %p75
      %p77 = scmp.ne.s32.totalorder %s66, %s69
      %p78 = scmp.eq.s32.totalorder %s19, 1
      %p79 = por %p77, %p78
      %p80 = scmp.ne.s32.totalorder %s69, %s70
      %p81 = scmp.eq.s32.totalorder %s19, 0
      %p82 = por %p80, %p81
      %p83 = scmp.ne.s32.totalorder %s69, %s70
      %p84 = scmp.eq.s32.totalorder %s20, 1
      %p85 = por %p83, %p84
      %p87 = scmp.ne.s32.totalorder %s70, %s86
      %p88 = scmp.eq.s32.totalorder %s20, 0
      %p89 = por %p87, %p88
      %s90 = ssub.s32 %s21, %s33
      %p91 = scmp.eq.s32.totalorder %s90, 0
      %s93 = sadd.s32 %s92, 1
      %s94 = scalar_select %p91, %s92, %s93
      %p97 = pneg %p91
      %p98 = scmp.eq.s32.totalorder %s14, 1
      %p99 = por %p97, %p98
      %p100 = scmp.ne.s32.totalorder %s92, %s95
      %p101 = scmp.eq.s32.totalorder %s14, 0
      %p102 = por %p100, %p101
      %p103 = scmp.ne.s32.totalorder %s92, %s95
      %p104 = scmp.eq.s32.totalorder %s19, 1
      %p105 = por %p103, %p104
      %p106 = scmp.ne.s32.totalorder %s95, %s96
      %p107 = scmp.eq.s32.totalorder %s19, 0
      %p108 = por %p106, %p107
      %p109 = scmp.ne.s32.totalorder %s95, %s96
      %p110 = scmp.eq.s32.totalorder %s20, 1
      %p111 = por %p109, %p110
      %p113 = scmp.ne.s32.totalorder %s96, %s112
      %p114 = scmp.eq.s32.totalorder %s20, 0
      %p115 = por %p113, %p114
      %s116 = ssub.s32 %s21, %s33
      %p117 = scmp.eq.s32.totalorder %s116, 0
      %s119 = sadd.s32 %s118, 1
      %s120 = scalar_select %p117, %s118, %s119
      %p123 = pneg %p117
      %p124 = scmp.eq.s32.totalorder %s14, 1
      %p125 = por %p123, %p124
      %p126 = scmp.ne.s32.totalorder %s118, %s121
      %p127 = scmp.eq.s32.totalorder %s14, 0
      %p128 = por %p126, %p127
      %p129 = scmp.ne.s32.totalorder %s118, %s121
      %p130 = scmp.eq.s32.totalorder %s19, 1
      %p131 = por %p129, %p130
      %p132 = scmp.ne.s32.totalorder %s121, %s122
      %p133 = scmp.eq.s32.totalorder %s19, 0
      %p134 = por %p132, %p133
      %p135 = scmp.ne.s32.totalorder %s121, %s122
      %p136 = scmp.eq.s32.totalorder %s20, 1
      %p137 = por %p135, %p136
      %p139 = scmp.ne.s32.totalorder %s122, %s138
      %p140 = scmp.eq.s32.totalorder %s20, 0
      %p141 = por %p139, %p140
      %s142 = ssub.s32 %s21, %s33
      %p143 = scmp.eq.s32.totalorder %s142, 0
      %s145 = sadd.s32 %s144, 1
      %s146 = scalar_select %p143, %s144, %s145
      %p149 = pneg %p143
      %p150 = scmp.eq.s32.totalorder %s14, 1
      %p151 = por %p149, %p150
      %p152 = scmp.ne.s32.totalorder %s144, %s147
      %p153 = scmp.eq.s32.totalorder %s14, 0
      %p154 = por %p152, %p153
      %p155 = scmp.ne.s32.totalorder %s144, %s147
      %p156 = scmp.eq.s32.totalorder %s19, 1
      %p157 = por %p155, %p156
      %p158 = scmp.ne.s32.totalorder %s147, %s148
      %p159 = scmp.eq.s32.totalorder %s19, 0
      %p160 = por %p158, %p159
      %p161 = scmp.ne.s32.totalorder %s147, %s148
      %p162 = scmp.eq.s32.totalorder %s20, 1
      %p163 = por %p161, %p162
      %p165 = scmp.ne.s32.totalorder %s148, %s164
      %p166 = scmp.eq.s32.totalorder %s20, 0
      %p167 = por %p165, %p166
      %p168 = scmp.le.s32.totalorder 1, %s14
      %p169 = scmp.lt.s32.totalorder %s14, 3
      %p170 = pnand %p168, %p169
      %p171 = pneg %p170
      // Predicated region
      $region9: #{_proto_sim.1} parent=5 // pred_check
        _
      $region10: #{_proto_sim.1} parent=5 // pred_check_branch
        %173 = sbr.rel (%p170) target = $region12
      $region11: #{_proto_sim.1} parent=5 // pred_region
        %s174 = ssub.s32 %s14, 1
      $region12: #{_proto_sim.1} parent=5 // pred_fallthru
        _
      %p175 = scmp.lt.s32.totalorder %s14, 2
      // Predicated region
      $region13: #{_proto_sim.1} parent=5 // pred_check
        %p176 = pneg %p175
      $region14: #{_proto_sim.1} parent=5 // pred_check_branch
        %178 = sbr.rel (%p176) target = $region16
      $region15: #{_proto_sim.1} parent=5 // pred_region
        // Predicated region
        $region17: #{_proto_sim.1} parent=15 // pred_check
          %p179 = pneg %p48
        $region18: #{_proto_sim.1} parent=15 // pred_check_branch
          %181 = sbr.rel (%p179) target = $region20
        $region19: #{_proto_sim.1} parent=15 // pred_region
          %p182 = scmp.lt.s32.totalorder %s21, 1
          %s183 = scalar_select %p182, %s21, 1
          %p184 = scmp.lt.s32.totalorder %s22, 0
          %s185 = scalar_select %p184, %s22, 0
          %s186 = sadd.s32 %s185, %s183
          %s187 = smul.addr %s186, 8
          %s188 = scalar_lea.vmem %s0, %s187
        $region20: #{_proto_sim.1} parent=15 // pred_fallthru
          _
        // Predicated region
        $region21: #{_proto_sim.1} parent=15 // pred_check
          %p189 = pneg %p76
        $region22: #{_proto_sim.1} parent=15 // pred_check_branch
          %191 = sbr.rel (%p189) target = $region24
        $region23: #{_proto_sim.1} parent=15 // pred_region
          %s192 = smul.u32 2, %s22
          %p193 = scmp.lt.s32.totalorder %s21, 1
          %s194 = scalar_select %p193, %s21, 1
          %p195 = scmp.lt.s32.totalorder %s192, 1
          %s196 = scalar_select %p195, %s192, 1
          %s197 = smul.addr %s194, 2
          %s198 = sadd.s32 %s196, %s197
          %s199 = smul.addr %s198, 8
          %s200 = scalar_lea.vmem %s1, %s199
          %s201 = smul.u32 2, %s22
        $region24: #{_proto_sim.1} parent=15 // pred_fallthru
          _
        // Predicated region
        $region25: #{_proto_sim.1} parent=15 // pred_check
          %p202 = pneg %p102
        $region26: #{_proto_sim.1} parent=15 // pred_check_branch
          %204 = sbr.rel (%p202) target = $region28
        $region27: #{_proto_sim.1} parent=15 // pred_region
          %s205 = sand.u32 %s92, 1
          %s206 = scalar_lea.sflag [#allocation5], %s205
          %s207 = sand.u32 %s92, 1
          %s208 = smul.addr %s207, 16
          %s209 = scalar_lea.vmem [#allocation4], %s208
          %s211 = ssub.s32 256, 256
          %212 = vsyncadd %s206, %s211
          %s213 = smul.addr %s21, 2
          %s214 = smul.addr %s213, 128
          %s215 = scalar_lea.hbm %s2, %s214
          %s216 = sshll.u32 %s209, 4
          %s217 = int_to_ptr.vmem [resolvable:$true] %s216
          %222 = dma.hbm_to_vmem [thread:$0]  %s215, 256, %s217, %s206, 128, 128, 8
        $region28: #{_proto_sim.1} parent=15 // pred_fallthru
          _
      $region16: #{_proto_sim.1} parent=5 // pred_fallthru
        _
      %p223 = scmp.le.s32.totalorder 1, %s14
      %p224 = scmp.lt.s32.totalorder %s14, 3
      %p225 = pnand %p223, %p224
      %p226 = pneg %p225
      // Predicated region
      $region29: #{_proto_sim.1} parent=5 // pred_check
        _
      $region30: #{_proto_sim.1} parent=5 // pred_check_branch
        %228 = sbr.rel (%p225) target = $region32
      $region31: #{_proto_sim.1} parent=5 // pred_region
        %s229 = ssub.s32 %s14, 1
        %s230 = sand.u32 %s95, 1
        %s231 = scalar_lea.sflag [#allocation5], %s230
        %s232 = sand.u32 %s95, 1
        %s233 = smul.addr %s232, 16
        %s234 = scalar_lea.vmem [#allocation4], %s233
        // Predicated region
        $region33: #{_proto_sim.1} parent=31 // pred_check
          %p235 = pneg %p108
        $region34: #{_proto_sim.1} parent=31 // pred_check_branch
          %237 = sbr.rel (%p235) target = $region36
        $region35: #{_proto_sim.1} parent=31 // pred_region
          %238 = dma.done %s231, 256
        $region36: #{_proto_sim.1} parent=31 // pred_fallthru
          _
        %p239 = scmp.lt.s32.totalorder %s23, 1
        %s240 = scalar_select %p239, %s23, 1
        %p241 = scmp.lt.s32.totalorder %s24, 0
        %s242 = scalar_select %p241, %s24, 0
        %s243 = sadd.s32 %s242, %s240
        %s244 = smul.addr %s243, 8
        %s245 = scalar_lea.vmem %s0, %s244
        %p246 = pneg %p54
        %p247 = pneg %p51
        %s248 = smul.u32 2, %s24
        %p249 = scmp.lt.s32.totalorder %s23, 1
        %s250 = scalar_select %p249, %s23, 1
        %p251 = scmp.lt.s32.totalorder %s248, 1
        %s252 = scalar_select %p251, %s248, 1
        %s253 = smul.addr %s250, 2
        %s254 = sadd.s32 %s252, %s253
        %s255 = smul.addr %s254, 8
        %s256 = scalar_lea.vmem %s1, %s255
        %p257 = pneg %p82
        %p258 = pneg %p79
        %s259 = sand.u32 %s95, 1
        %s260 = scalar_lea.sflag [#allocation5], %s259
        %s261 = sand.u32 %s95, 1
        %s262 = smul.addr %s261, 16
        %s263 = scalar_lea.vmem [#allocation4], %s262
        %p264 = pneg %p108
        %p265 = pneg %p105
        %p266 = pneg %p134
        %p267 = pneg %p131
        %p268 = scmp.lt.s32.totalorder %s23, 1
        %s269 = scalar_select %p268, %s23, 1
        %s270 = smul.addr %s269, 8
        %s271 = scalar_lea.vmem %s3, %s270
        %p272 = pneg %p160
        %p273 = pneg %p157
        %p274 = scmp.lt.s32.totalorder %s23, 1
        %s275 = scalar_select %p274, %s23, 1
        %s276 = smul.addr %s275, 8
        %s277 = scalar_lea.vmem %s4, %s276
        %p278 = scmp.lt.s32.totalorder %s23, 1
        %s279 = scalar_select %p278, %s23, 1
        %p280 = scmp.lt.s32.totalorder %s24, 0
        %s281 = scalar_select %p280, %s24, 0
        %s282 = sadd.s32 %s281, %s279
        %s283 = smul.addr %s282, 8
        %s284 = scalar_lea.vmem %s0, %s283
        %s285 = smul.u32 2, %s24
        %p286 = scmp.lt.s32.totalorder %s23, 1
        %s287 = scalar_select %p286, %s23, 1
        %p288 = scmp.lt.s32.totalorder %s285, 1
        %s289 = scalar_select %p288, %s285, 1
        %s290 = smul.addr %s287, 2
        %s291 = sadd.s32 %s289, %s290
        %s292 = smul.addr %s291, 8
        %s293 = scalar_lea.vmem %s1, %s292
        %s294 = smul.u32 2, %s24
        %p295 = scmp.lt.s32.totalorder %s23, 1
        %s296 = scalar_select %p295, %s23, 1
        %s297 = smul.addr %s296, 8
        %s298 = scalar_lea.vmem %s3, %s297
        %p299 = scmp.lt.s32.totalorder %s23, 1
        %s300 = scalar_select %p299, %s23, 1
        %s301 = smul.addr %s300, 8
        %s302 = scalar_lea.vmem %s4, %s301
        %p304 = scmp.eq.s32.totalorder %s24, 0
        // Predicated region
        $region37: #{_proto_sim.1} parent=31 // pred_check
          %p305 = pneg %p304
        $region38: #{_proto_sim.1} parent=31 // pred_check_branch
          %307 = sbr.rel (%p305) target = $region40
        $region39: #{_proto_sim.1} parent=31 // pred_region
          %vm308 = vcmask 258048
          %309 = vst.msk [vmem:[#allocation2] sm:$0x1f] %vm308, 0.0
          %vm310 = vcmask 4096
          %311 = vst.msk [vmem:[#allocation3] sm:$0x1f] %vm310, 0.0
        $region40: #{_proto_sim.1} parent=31 // pred_fallthru
          _
        %v312 = vld [vmem:[%s284] sm:$0x1f]
        %v313 = vld [vmem:[%s293] sm:$0xff]
        %v314 = vld [vmem:[%s293 + $0x8] sm:$0xff]
        %v315 = vld [vmem:[#allocation2] sm:$0x1f]
        %v316 = vpack.c.bf16 %v312, %v312
        %v317 = vpack.c.bf16 %v314, %v313
        %vm318 = vcmask 130048
        %v320 = vsel %vm318, %v316, 0
        %322 = vmatprep.subr.bf16.mxu0 0
        %323 = vmatpush1.bf16.msra.mxu0 %v317
        %324 = vmatprep.subr.bf16.mxu0 0
        %325 = vmatpush1.bf16.msra.mxu0 0
        %326 = vmatprep.subr.bf16.mxu0 0
        %327 = vmatpush1.bf16.msra.mxu0 0
        %328 = vmatprep.subr.bf16.mxu0 0
        %329 = vmatpush1.bf16.msra.mxu0 0
        %330 = vmatprep.subr.bf16.mxu0 0
        %331 = vmatpush1.bf16.msra.mxu0 0
        %332 = vmatprep.subr.bf16.mxu0 0
        %333 = vmatpush1.bf16.msra.mxu0 0
        %334 = vmatprep.subr.bf16.mxu0 0
        %335 = vmatpush1.bf16.msra.mxu0 0
        %336 = vmatprep.subr.bf16.mxu0 0
        %337 = vmatpush1.bf16.msra.mxu0 0
        %338 = vmatprep.subr.bf16.mxu0 0
        %339 = vmatpush1.bf16.msra.mxu0 0
        %340 = vmatprep.subr.bf16.mxu0 0
        %341 = vmatpush1.bf16.msra.mxu0 0
        %342 = vmatprep.subr.bf16.mxu0 0
        %343 = vmatpush1.bf16.msra.mxu0 0
        %344 = vmatprep.subr.bf16.mxu0 0
        %345 = vmatpush1.bf16.msra.mxu0 0
        %346 = vmatprep.subr.bf16.mxu0 0
        %347 = vmatpush1.bf16.msra.mxu0 0
        %348 = vmatprep.subr.bf16.mxu0 0
        %349 = vmatpush1.bf16.msra.mxu0 0
        %350 = vmatprep.subr.bf16.mxu0 0
        %351 = vmatpush1.bf16.msra.mxu0 0
        %352 = vmatprep.subr.bf16.mxu0 0
        %353 = vmatpush1.bf16.msra.mxu0 0
        %354 = vmatprep.mubr.bf16.mxu0 0
        %355 = vmatmul.mubr.bf16.gmra.mrb[0].mxu0 %v320
        %v356 = vpop.f32.mrb[0].mxu0
        %v357 = vadd.f32 0.0, %v356
        %v358 = vpop.f32.mrb[0].mxu0
        %v359 = vpop.f32.mrb[0].mxu0
        %v360 = vpop.f32.mrb[0].mxu0
        %361 = vdwg.mxu0
        %v362 = vadd.f32 %v315, %v357
        %vm363 = vcmask 258048
        %364 = vst.msk [vmem:[#allocation2] sm:$0x1f] %vm363, %v362
        %v365 = vld [vmem:[#allocation3] sm:$0x1f]
        %vm366 = vcmask 126976
        %v367 = vsel %vm366, %v312, 0.0
        %368 = vadd.xlane.f32.xlu0 %v367
        %v369 = vpop.xlane.xlu0 %368
        %v370 = vadd.f32 %v365, %v369
        %vm371 = vcmask 4096
        %372 = vst.msk [vmem:[#allocation3] sm:$0x1f] %vm371, %v370
        // Predicated region
        $region41: #{_proto_sim.1} parent=31 // pred_check
          %p373 = pneg %p304
        $region42: #{_proto_sim.1} parent=31 // pred_check_branch
          %375 = sbr.rel (%p373) target = $region44
        $region43: #{_proto_sim.1} parent=31 // pred_region
          %v376 = vld [vmem:[#allocation3] sm:$0x1f]
          %v377 = vadd.f32 %v376, 0.0001
          %v378 = vrcp.pop %v377
          %v379 = vmul.f32 1.0, %v378
          %v380 = vld [vmem:[#allocation2] sm:$0x1f]
          %382 = vset.pattern.permute.xlu0 0
          %383 = vperm.xlu0 %382, %v379
          %v384 = vpop.permute.xlu0 %383
          %v386 = vmul.f32 %v380, %v384
          %387 = vst.msk [vmem:[%s302] sm:$0x1f] %vm363, %v386
          %v388 = vld [vmem:[%s234] sm:$0xff]
          %v389 = vld [vmem:[%s234 + $0x8] sm:$0xff]
          %vm390 = vcmask 261120
          %v391 = vsel %vm390, %v388, 0.0
          %v392 = vsel %vm390, %v389, 0.0
          %v393 = vadd.f32 %v391, %v392
          %v394 = vrcp.pop 2.0
          %v395 = vmul.f32 %v393, %v394
          %v396 = vpack.c.bf16 %v395, %v395
          %v397 = vpack.c.bf16 %v386, %v386
          %v399 = vsel %vm390, %v396, 0
          %v402 = vsel %vm390, %v397, 0
          %404 = vmatprep.subr.bf16.mxu0 0
          %405 = vmatpush1.bf16.xpose.msra.mxu0 %v402
          %406 = vmatprep.subr.bf16.mxu0 0
          %407 = vmatpush1.bf16.xpose.msra.mxu0 0
          %408 = vmatprep.subr.bf16.mxu0 0
          %409 = vmatpush1.bf16.xpose.msra.mxu0 0
          %410 = vmatprep.subr.bf16.mxu0 0
          %411 = vmatpush1.bf16.xpose.msra.mxu0 0
          %412 = vmatprep.subr.bf16.mxu0 0
          %413 = vmatpush1.bf16.xpose.msra.mxu0 0
          %414 = vmatprep.subr.bf16.mxu0 0
          %415 = vmatpush1.bf16.xpose.msra.mxu0 0
          %416 = vmatprep.subr.bf16.mxu0 0
          %417 = vmatpush1.bf16.xpose.msra.mxu0 0
          %418 = vmatprep.subr.bf16.mxu0 0
          %419 = vmatpush1.bf16.xpose.msra.mxu0 0
          %420 = vmatprep.subr.bf16.mxu0 0
          %421 = vmatpush1.bf16.xpose.msra.mxu0 0
          %422 = vmatprep.subr.bf16.mxu0 0
          %423 = vmatpush1.bf16.xpose.msra.mxu0 0
          %424 = vmatprep.subr.bf16.mxu0 0
          %425 = vmatpush1.bf16.xpose.msra.mxu0 0
          %426 = vmatprep.subr.bf16.mxu0 0
          %427 = vmatpush1.bf16.xpose.msra.mxu0 0
          %428 = vmatprep.subr.bf16.mxu0 0
          %429 = vmatpush1.bf16.xpose.msra.mxu0 0
          %430 = vmatprep.subr.bf16.mxu0 0
          %431 = vmatpush1.bf16.xpose.msra.mxu0 0
          %432 = vmatprep.subr.bf16.mxu0 0
          %433 = vmatpush1.bf16.xpose.msra.mxu0 0
          %434 = vmatprep.subr.bf16.mxu0 0
          %435 = vmatpush1.bf16.xpose.msra.mxu0 0
          %436 = vmatprep.mubr.bf16.mxu0 0
          %437 = vmatmul.mubr.bf16.gmra.mrb[0].mxu0 %v399
          %v438 = vpop.f32.mrb[0].mxu0
          %v439 = vadd.f32 0.0, %v438
          %v440 = vpop.f32.mrb[0].mxu0
          %v441 = vpop.f32.mrb[0].mxu0
          %v442 = vpop.f32.mrb[0].mxu0
          %443 = vdwg.mxu0
          %vm444 = vcmask 39936
          %445 = vst.msk [vmem:[%s298] sm:$0xff] %vm444, %v439
        $region44: #{_proto_sim.1} parent=31 // pred_fallthru
          _
        %p446 = scmp.lt.s32.totalorder %s23, 1
        %s447 = scalar_select %p446, %s23, 1
        %s448 = smul.addr %s447, 8
        %s449 = scalar_lea.vmem %s3, %s448
        %p450 = scmp.lt.s32.totalorder %s23, 1
        %s451 = scalar_select %p450, %s23, 1
        %s452 = smul.addr %s451, 8
        %s453 = scalar_lea.vmem %s4, %s452
        // Predicated region
        $region45: #{_proto_sim.1} parent=31 // pred_check
          %p454 = pneg %p131
        $region46: #{_proto_sim.1} parent=31 // pred_check_branch
          %456 = sbr.rel (%p454) target = $region48
        $region47: #{_proto_sim.1} parent=31 // pred_region
          _
        $region48: #{_proto_sim.1} parent=31 // pred_fallthru
          _
        // Predicated region
        $region49: #{_proto_sim.1} parent=31 // pred_check
          %p457 = pneg %p157
        $region50: #{_proto_sim.1} parent=31 // pred_check_branch
          %459 = sbr.rel (%p457) target = $region52
        $region51: #{_proto_sim.1} parent=31 // pred_region
          _
        $region52: #{_proto_sim.1} parent=31 // pred_fallthru
          _
      $region32: #{_proto_sim.1} parent=5 // pred_fallthru
        _
      %p460 = scmp.le.s32.totalorder 2, %s14
      // Predicated region
      $region53: #{_proto_sim.1} parent=5 // pred_check
        %p461 = pneg %p460
      $region54: #{_proto_sim.1} parent=5 // pred_check_branch
        %463 = sbr.rel (%p461) target = $region56
      $region55: #{_proto_sim.1} parent=5 // pred_region
        %s464 = ssub.s32 %s14, 2
        // Predicated region
        $region57: #{_proto_sim.1} parent=55 // pred_check
          %p465 = pneg %p137
        $region58: #{_proto_sim.1} parent=55 // pred_check_branch
          %467 = sbr.rel (%p465) target = $region60
        $region59: #{_proto_sim.1} parent=55 // pred_region
          %p468 = scmp.lt.s32.totalorder %s25, 1
          %s469 = scalar_select %p468, %s25, 1
          %s470 = smul.addr %s469, 8
          %s471 = scalar_lea.vmem %s3, %s470
        $region60: #{_proto_sim.1} parent=55 // pred_fallthru
          _
        // Predicated region
        $region61: #{_proto_sim.1} parent=55 // pred_check
          %p472 = pneg %p163
        $region62: #{_proto_sim.1} parent=55 // pred_check_branch
          %474 = sbr.rel (%p472) target = $region64
        $region63: #{_proto_sim.1} parent=55 // pred_region
          %p475 = scmp.lt.s32.totalorder %s25, 1
          %s476 = scalar_select %p475, %s25, 1
          %s477 = smul.addr %s476, 8
          %s478 = scalar_lea.vmem %s4, %s477
        $region64: #{_proto_sim.1} parent=55 // pred_fallthru
          _
      $region56: #{_proto_sim.1} parent=5 // pred_fallthru
        _
    $region6: #{_proto_sim.1} parent=1 // loop_footer
      %s18 = sadd.s32 1, %s14
    $region7: #{_proto_sim.1} parent=1 // loop_footer_branch
      %13 = sbr.rel target = $region3
    $region8: #{_proto_sim.1} parent=1 // loop_exit
      _
    %479 = vsyncpa [#allocation5], 1
    %s480 = scalar_lea.sflag [#allocation5], 1
    %481 = vsyncpa %s480, 1

</llo_original>
